<compile_context>
chip_gen: v7x
topology: tpu7x:2x2x1
jax: 0.10.0
libtpu: 0.0.40
codegen_flags: <defaults>
</compile_context>

<pallas_src>
import functools

import jax
import jax.numpy as jnp
from jax import lax
from jax.experimental import pallas as pl
from jax.experimental.pallas import tpu as pltpu

BN_EPS = 1e-5


# ----------------------------- kernels ---------------------------------------


def _convt_bias_elu(x_ref, w_ref, b_ref, b_idx, *, k_taps, apply_elu):
    """Transposed conv + bias (+ ELU) for batch element `b_idx` of the block.

    x_ref: (TB, C_in, Lp)   stride-dilated + padded input (matmul dtype)
    w_ref: (K, TCo, C_in)   tap-k matrix = weight[:, co_tile, K-1-k].T
    b_ref: (TCo, 1)         f32 bias
    returns (TCo, L_out) f32 with L_out on the 128-lane axis.
    """
    x = x_ref[b_idx]                               # (C_in, Lp)
    l_out = x.shape[-1] - (k_taps - 1)
    acc = jnp.zeros((w_ref.shape[1], l_out), jnp.float32)
    for k in range(k_taps):                        # static, unrolled (K = 3)
        acc += jnp.dot(w_ref[k], x[:, k:k + l_out],
                       preferred_element_type=jnp.float32)
    y = acc + b_ref[...]                           # bias broadcast over lanes
    if apply_elu:
        # ELU(alpha=1).  exp(y)-1 uses the EUP-native exp; expm1 only buys
        # ~1e-7 abs accuracy near 0, far below the bf16 matmul-feed noise.
        y = jnp.where(y > 0.0, y, jnp.exp(y) - 1.0)
    return y


def _stats_kernel(x_ref, w_ref, b_ref, sum_ref, sq_ref, *, k_taps, tb):
    """Pass 1: per-sample, per-channel sum / sum-of-squares of ELU(convT + b)."""
    for b in range(tb):
        y = _convt_bias_elu(x_ref, w_ref, b_ref, b, k_taps=k_taps, apply_elu=True)
        sum_ref[b] = jnp.sum(y, axis=-1, keepdims=True)       # (TCo, 1)
        sq_ref[b] = jnp.sum(y * y, axis=-1, keepdims=True)
    # TODO(synk): lane-width-1 stats blocks -> masked stores + tiny DMAs; if
    # they ever show in a profile, accumulate in a VMEM scratch over an
    # "arbitrary" batch axis and write once at the last step.


def _apply_kernel(x_ref, w_ref, b_ref, scale_ref, shift_ref, o_ref, *, k_taps, tb):
    """Pass 2: recompute conv+ELU and apply the folded BatchNorm affine."""
    for b in range(tb):
        y = _convt_bias_elu(x_ref, w_ref, b_ref, b, k_taps=k_taps, apply_elu=True)
        o_ref[b] = y * scale_ref[...] + shift_ref[...]


def _conv_only_kernel(x_ref, w_ref, b_ref, o_ref, *, k_taps, tb):
    """final_layer=True path: transposed conv + bias only."""
    for b in range(tb):
        o_ref[b] = _convt_bias_elu(x_ref, w_ref, b_ref, b, k_taps=k_taps,
                                   apply_elu=False)


# ----------------------------- wrapper ----------------------------------------


def _pick_batch_tile(n, per_sample_bytes, target_bytes=1 << 20,
                     max_bytes=8 << 20, max_tb=8):
    """Largest divisor of n (<= max_tb) whose per-step block reaches ~1 MiB,
    capped so double-buffered in+out blocks stay well inside scoped VMEM."""
    best = 1
    for tb in range(1, min(n, max_tb) + 1):
        if n % tb:
            continue
        if tb > 1 and tb * per_sample_bytes > max_bytes:
            break
        best = tb
        if tb * per_sample_bytes >= target_bytes:
            break
    return best


def conv1d_transpose_block(x, weight, bias, gamma, beta, *,
                           stride=2, padding=1, output_padding=1,
                           final_layer=False, matmul_dtype=jnp.bfloat16):
    """Forward of Conv1dTransposeBlock.

    x: (N, C_in, L); weight: (C_in, C_out, K) [PyTorch ConvTranspose1d layout];
    bias/gamma/beta: (C_out,).  Returns (N, C_out, L_out) f32 with
    L_out = (L-1)*stride - 2*padding + K + output_padding.
    """
    N, C_in, L = x.shape
    _, C_out, K = weight.shape
    assert 0 <= padding <= K - 1, "kernel specializes to padding <= K-1"
    assert 0 <= output_padding < stride
    L_out = (L - 1) * stride - 2 * padding + K + output_padding
    Lp = L_out + K - 1
    left = K - 1 - padding
    right = Lp - left - (stride * (L - 1) + 1)
    assert right >= 0

    # Stride-dilated + padded input, built by one XLA interior-pad op, directly
    # in the matmul feed dtype (bf16 by default -> half the bytes of f32 x).
    x_pad = lax.pad(x.astype(matmul_dtype), jnp.zeros((), matmul_dtype),
                    [(0, 0, 0), (0, 0, 0), (left, right, stride - 1)])

    # tap-k weight matrix: w_taps[k] = weight[:, :, K-1-k].T -> (K, C_out, C_in)
    w_taps = jnp.flip(weight, axis=2).transpose(2, 1, 0).astype(matmul_dtype)
    b2 = bias.reshape(C_out, 1).astype(jnp.float32)

    # ---- tiling -----------------------------------------------------------
    x_item = jnp.dtype(matmul_dtype).itemsize
    per_sample_bytes = C_in * Lp * x_item + C_out * L_out * 4
    TB = _pick_batch_tile(N, per_sample_bytes)
    n_b = N // TB
    # Optional C_out split: a second "parallel" axis so v7x's two TensorCores
    # stay busy even when the batch axis alone cannot be split across them.
    if n_b < 2 and C_out % 16 == 0:
        TCo = C_out // 2
    else:
        TCo = C_out
    n_co = C_out // TCo
    grid = (n_b, n_co)

    x_spec = pl.BlockSpec((TB, C_in, Lp), lambda b, c: (b, 0, 0))
    w_spec = pl.BlockSpec((K, TCo, C_in), lambda b, c: (0, c, 0))
    v_spec = pl.BlockSpec((TCo, 1), lambda b, c: (c, 0))
    o_spec = pl.BlockSpec((TB, TCo, L_out), lambda b, c: (b, c, 0))
    s_spec = pl.BlockSpec((TB, TCo, 1), lambda b, c: (b, c, 0))
    cparams = pltpu.CompilerParams(
        dimension_semantics=("parallel", "parallel"))

    matmul_flops = 2 * N * K * C_in * C_out * L_out
    conv_bytes = (N * C_in * Lp * x_item * n_co            # x_pad per co tile
                  + K * C_out * C_in * x_item * n_b + 4 * C_out * n_b)

    if final_layer:
        return pl.pallas_call(
            functools.partial(_conv_only_kernel, k_taps=K, tb=TB),
            out_shape=jax.ShapeDtypeStruct((N, C_out, L_out), jnp.float32),
            grid=grid,
            in_specs=[x_spec, w_spec, v_spec],
            out_specs=o_spec,
            compiler_params=cparams,
            cost_estimate=pl.CostEstimate(
                flops=matmul_flops, transcendentals=0,
                bytes_accessed=conv_bytes + 4 * N * C_out * L_out),
        )(x_pad, w_taps, b2)

    # ---- pass 1: per-sample per-channel sum / sum-of-squares ----------------
    sums, sqs = pl.pallas_call(
        functools.partial(_stats_kernel, k_taps=K, tb=TB),
        out_shape=(jax.ShapeDtypeStruct((N, C_out, 1), jnp.float32),
                   jax.ShapeDtypeStruct((N, C_out, 1), jnp.float32)),
        grid=grid,
        in_specs=[x_spec, w_spec, v_spec],
        out_specs=(s_spec, s_spec),
        compiler_params=cparams,
        cost_estimate=pl.CostEstimate(
            flops=matmul_flops + 3 * N * C_out * L_out,
            transcendentals=N * C_out * L_out,
            bytes_accessed=conv_bytes + 8 * N * C_out),
    )(x_pad, w_taps, b2)

    # ---- tiny global reduction + folded BN affine (plain JAX, negligible) ----
    count = N * L_out
    mean = jnp.sum(sums[:, :, 0], axis=0) / count
    # biased variance (what BN uses to normalize); clamp >= 0 to guard f32
    # E[y^2] - E[y]^2 cancellation for large N*L_out.
    var = jnp.maximum(jnp.sum(sqs[:, :, 0], axis=0) / count - mean * mean, 0.0)
    scale = gamma.astype(jnp.float32) * lax.rsqrt(var + BN_EPS)
    shift = beta.astype(jnp.float32) - mean * scale

    # ---- pass 2: recompute conv+ELU, apply y*scale + shift, lane-dense NCL ---
    # Recomputing avoids an HBM round trip of the (N, C_out, L_out) activations.
    out = pl.pallas_call(
        functools.partial(_apply_kernel, k_taps=K, tb=TB),
        out_shape=jax.ShapeDtypeStruct((N, C_out, L_out), jnp.float32),
        grid=grid,
        in_specs=[x_spec, w_spec, v_spec, v_spec, v_spec],
        out_specs=o_spec,
        compiler_params=cparams,
        cost_estimate=pl.CostEstimate(
            flops=matmul_flops + 2 * N * C_out * L_out,
            transcendentals=N * C_out * L_out,
            bytes_accessed=conv_bytes + 4 * N * C_out * L_out),
    )(x_pad, w_taps, b2, scale.reshape(C_out, 1), shift.reshape(C_out, 1))
    return out


# ----------------------------- references -------------------------------------


def _reference_convt(x, weight, bias, *, stride=2, padding=1, output_padding=1):
    """Pure-JAX ConvTranspose1d matching PyTorch semantics."""
    C_in, C_out, K = weight.shape
    w_oik = jnp.flip(weight, axis=2).transpose(1, 0, 2)       # (C_out, C_in, K)
    y = lax.conv_general_dilated(
        x, w_oik, window_strides=(1,),
        padding=[(K - 1 - padding, K - 1 - padding + output_padding)],
        lhs_dilation=(stride,),
        dimension_numbers=("NCH", "OIH", "NCH"))
    return y + bias[None, :, None]


def _reference_block(x, weight, bias, gamma, beta, **kw):
    y = _reference_convt(x, weight, bias, **kw)
    y = jnp.where(y > 0.0, y, jnp.exp(y) - 1.0)               # ELU
    mean = jnp.mean(y, axis=(0, 2), keepdims=True)
    var = jnp.mean((y - mean) ** 2, axis=(0, 2), keepdims=True)
    y = (y - mean) * lax.rsqrt(var + BN_EPS)
    return y * gamma[None, :, None] + beta[None, :, None]


# ----------------------------- demo / check -----------------------------------


if __name__ == "__main__":
    N, C_in, L = 2, 4, 16
    C_out, K, stride, padding, output_padding = 8, 3, 2, 1, 1
    L_out = (L - 1) * stride - 2 * padding + K + output_padding   # = 32

    key = jax.random.PRNGKey(0)
    kx, kw, kb, kg, kbeta = jax.random.split(key, 5)
    x = jax.random.normal(kx, (N, C_in, L), dtype=jnp.float32)
    bound = 1.0 / (C_in * K) ** 0.5
    # PyTorch ConvTranspose1d weight layout: (in_channels, out_channels, K)
    weight = jax.random.uniform(kw, (C_in, C_out, K), jnp.float32, -bound, bound)
    bias = jax.random.uniform(kb, (C_out,), jnp.float32, -bound, bound)
    gamma = 1.0 + 0.1 * jax.random.normal(kg, (C_out,), jnp.float32)
    beta = 0.1 * jax.random.normal(kbeta, (C_out,), jnp.float32)

    kw_common = dict(stride=stride, padding=padding, output_padding=output_padding)
    ref = _reference_block(x, weight, bias, gamma, beta, **kw_common)
    ref_f = _reference_convt(x, weight, bias, **kw_common)

    # 1) f32 matmul feeds: tight check of the algorithm.
    out32 = conv1d_transpose_block(x, weight, bias, gamma, beta,
                                   matmul_dtype=jnp.float32, **kw_common)
    jax.block_until_ready(out32)
    assert out32.shape == (N, C_out, L_out)
    err32 = float(jnp.max(jnp.abs(out32 - ref)))
    assert jnp.allclose(out32, ref, atol=5e-4, rtol=5e-4), f"f32 max abs err {err32}"

    # 2) default bf16 matmul feeds (MXU-native on v5e/v6e/v7x): looser tolerance,
    #    post-matmul math is still f32.
    out16 = conv1d_transpose_block(x, weight, bias, gamma, beta, **kw_common)
    jax.block_until_ready(out16)
    err16 = float(jnp.max(jnp.abs(out16 - ref)))
    assert jnp.allclose(out16, ref, atol=5e-2, rtol=5e-2), f"bf16 max abs err {err16}"

    # 3) final_layer=True path: bare transposed conv + bias.
    out_f = conv1d_transpose_block(x, weight, bias, gamma, beta,
                                   final_layer=True, matmul_dtype=jnp.float32,
                                   **kw_common)
    jax.block_until_ready(out_f)
    err_f = float(jnp.max(jnp.abs(out_f - ref_f)))
    assert jnp.allclose(out_f, ref_f, atol=1e-4, rtol=1e-4), f"convT max abs err {err_f}"

    print("KERNEL_OK")
</pallas_src>

<mosaic_0001>
module attributes {stable_mosaic.version = 11 : i64} {
  func.func @_stats_kernel(%arg0: i32, %arg1: i32, %arg2: memref<2x4x34xf32, #tpu.memory_space<vmem>>, %arg3: memref<3x8x4xf32, #tpu.memory_space<vmem>>, %arg4: memref<8x1xf32, #tpu.memory_space<vmem>>, %arg5: memref<2x8x1xf32, #tpu.memory_space<vmem>>, %arg6: memref<2x8x1xf32, #tpu.memory_space<vmem>>) attributes {dimension_semantics = [#tpu.dimension_semantics<parallel>, #tpu.dimension_semantics<parallel>], iteration_bounds = array<i64: 1, 1>, scalar_prefetch = 0 : i64, scratch_operands = 0 : i64, tpu.core_type = #tpu.core_type<tc>, window_params = [{transform_indices = @transform_0, window_bounds = array<i64: 2, 4, 34>}, {transform_indices = @transform_1, window_bounds = array<i64: 3, 8, 4>}, {transform_indices = @transform_2, window_bounds = array<i64: 8, 1>}, {transform_indices = @transform_3, window_bounds = array<i64: 2, 8, 1>}, {transform_indices = @transform_4, window_bounds = array<i64: 2, 8, 1>}]} {
    %c0 = arith.constant 0 : index
    %c0_0 = arith.constant 0 : index
    %c0_1 = arith.constant 0 : index
    %0 = vector.load %arg2[%c0, %c0_0, %c0_1] : memref<2x4x34xf32, #tpu.memory_space<vmem>>, vector<1x4x34xf32>
    %1 = vector.shape_cast %0 : vector<1x4x34xf32> to vector<4x34xf32>
    %cst = arith.constant 0.000000e+00 : f32
    %2 = vector.broadcast %cst : f32 to vector<8x32xf32>
    %c0_2 = arith.constant 0 : index
    %c0_3 = arith.constant 0 : index
    %c0_4 = arith.constant 0 : index
    %3 = vector.load %arg3[%c0_2, %c0_3, %c0_4] : memref<3x8x4xf32, #tpu.memory_space<vmem>>, vector<1x8x4xf32>
    %4 = vector.shape_cast %3 : vector<1x8x4xf32> to vector<8x4xf32>
    %5 = vector.extract_strided_slice %1 {offsets = [0, 0], sizes = [4, 32], strides = [1, 1]} : vector<4x34xf32> to vector<4x32xf32>
    %cst_5 = arith.constant dense<0.000000e+00> : vector<8x32xf32>
    %6 = tpu.matmul %4, %5, %cst_5 {dimension_numbers = #tpu.dot_dimension_numbers<[1], [0], [0], [1], [0, 0, 1, 1], [], []>} : vector<8x4xf32>, vector<4x32xf32>, vector<8x32xf32> -> vector<8x32xf32>
    %7 = arith.addf %2, %6 : vector<8x32xf32>
    %c1 = arith.constant 1 : index
    %c0_6 = arith.constant 0 : index
    %c0_7 = arith.constant 0 : index
    %8 = vector.load %arg3[%c1, %c0_6, %c0_7] : memref<3x8x4xf32, #tpu.memory_space<vmem>>, vector<1x8x4xf32>
    %9 = vector.shape_cast %8 : vector<1x8x4xf32> to vector<8x4xf32>
    %10 = vector.extract_strided_slice %1 {offsets = [0, 1], sizes = [4, 32], strides = [1, 1]} : vector<4x34xf32> to vector<4x32xf32>
    %cst_8 = arith.constant dense<0.000000e+00> : vector<8x32xf32>
    %11 = tpu.matmul %9, %10, %cst_8 {dimension_numbers = #tpu.dot_dimension_numbers<[1], [0], [0], [1], [0, 0, 1, 1], [], []>} : vector<8x4xf32>, vector<4x32xf32>, vector<8x32xf32> -> vector<8x32xf32>
    %12 = arith.addf %7, %11 : vector<8x32xf32>
    %c2 = arith.constant 2 : index
    %c0_9 = arith.constant 0 : index
    %c0_10 = arith.constant 0 : index
    %13 = vector.load %arg3[%c2, %c0_9, %c0_10] : memref<3x8x4xf32, #tpu.memory_space<vmem>>, vector<1x8x4xf32>
    %14 = vector.shape_cast %13 : vector<1x8x4xf32> to vector<8x4xf32>
    %15 = vector.extract_strided_slice %1 {offsets = [0, 2], sizes = [4, 32], strides = [1, 1]} : vector<4x34xf32> to vector<4x32xf32>
    %cst_11 = arith.constant dense<0.000000e+00> : vector<8x32xf32>
    %16 = tpu.matmul %14, %15, %cst_11 {dimension_numbers = #tpu.dot_dimension_numbers<[1], [0], [0], [1], [0, 0, 1, 1], [], []>} : vector<8x4xf32>, vector<4x32xf32>, vector<8x32xf32> -> vector<8x32xf32>
    %17 = arith.addf %12, %16 : vector<8x32xf32>
    %c0_12 = arith.constant 0 : index
    %c0_13 = arith.constant 0 : index
    %18 = vector.load %arg4[%c0_12, %c0_13] : memref<8x1xf32, #tpu.memory_space<vmem>>, vector<8x1xf32>
    %19 = vector.broadcast %18 : vector<8x1xf32> to vector<8x32xf32>
    %20 = arith.addf %17, %19 : vector<8x32xf32>
    %cst_14 = arith.constant 0.000000e+00 : f32
    %21 = vector.broadcast %cst_14 : f32 to vector<8x32xf32>
    %22 = arith.cmpf ogt, %20, %21 : vector<8x32xf32>
    %23 = math.exp %20 : vector<8x32xf32>
    %cst_15 = arith.constant 1.000000e+00 : f32
    %24 = vector.broadcast %cst_15 : f32 to vector<8x32xf32>
    %25 = arith.subf %23, %24 : vector<8x32xf32>
    %26 = arith.select %22, %20, %25 : vector<8x32xi1>, vector<8x32xf32>
    %cst_16 = arith.constant dense<0.000000e+00> : vector<8xf32>
    %27 = vector.multi_reduction <add>, %26, %cst_16 [1] : vector<8x32xf32> to vector<8xf32>
    %28 = vector.shape_cast %27 : vector<8xf32> to vector<8x1xf32>
    %c0_17 = arith.constant 0 : index
    %c0_18 = arith.constant 0 : index
    %c0_19 = arith.constant 0 : index
    %29 = vector.load %arg5[%c0_17, %c0_18, %c0_19] : memref<2x8x1xf32, #tpu.memory_space<vmem>>, vector<1x8x1xf32>
    %30 = vector.shape_cast %29 : vector<1x8x1xf32> to vector<8x1xf32>
    %31 = vector.shape_cast %28 : vector<8x1xf32> to vector<1x8x1xf32>
    tpu.vector_store %arg5[%c0_17, %c0_18, %c0_19], %31 {strides = array<i32>} : memref<2x8x1xf32, #tpu.memory_space<vmem>>, vector<1x8x1xf32>,
    %32 = arith.mulf %26, %26 : vector<8x32xf32>
    %cst_20 = arith.constant dense<0.000000e+00> : vector<8xf32>
    %33 = vector.multi_reduction <add>, %32, %cst_20 [1] : vector<8x32xf32> to vector<8xf32>
    %34 = vector.shape_cast %33 : vector<8xf32> to vector<8x1xf32>
    %c0_21 = arith.constant 0 : index
    %c0_22 = arith.constant 0 : index
    %c0_23 = arith.constant 0 : index
    %35 = vector.load %arg6[%c0_21, %c0_22, %c0_23] : memref<2x8x1xf32, #tpu.memory_space<vmem>>, vector<1x8x1xf32>
    %36 = vector.shape_cast %35 : vector<1x8x1xf32> to vector<8x1xf32>
    %37 = vector.shape_cast %34 : vector<8x1xf32> to vector<1x8x1xf32>
    tpu.vector_store %arg6[%c0_21, %c0_22, %c0_23], %37 {strides = array<i32>} : memref<2x8x1xf32, #tpu.memory_space<vmem>>, vector<1x8x1xf32>,
    %c1_24 = arith.constant 1 : index
    %c0_25 = arith.constant 0 : index
    %c0_26 = arith.constant 0 : index
    %38 = vector.load %arg2[%c1_24, %c0_25, %c0_26] : memref<2x4x34xf32, #tpu.memory_space<vmem>>, vector<1x4x34xf32>
    %39 = vector.shape_cast %38 : vector<1x4x34xf32> to vector<4x34xf32>
    %cst_27 = arith.constant 0.000000e+00 : f32
    %40 = vector.broadcast %cst_27 : f32 to vector<8x32xf32>
    %c0_28 = arith.constant 0 : index
    %c0_29 = arith.constant 0 : index
    %c0_30 = arith.constant 0 : index
    %41 = vector.load %arg3[%c0_28, %c0_29, %c0_30] : memref<3x8x4xf32, #tpu.memory_space<vmem>>, vector<1x8x4xf32>
    %42 = vector.shape_cast %41 : vector<1x8x4xf32> to vector<8x4xf32>
    %43 = vector.extract_strided_slice %39 {offsets = [0, 0], sizes = [4, 32], strides = [1, 1]} : vector<4x34xf32> to vector<4x32xf32>
    %cst_31 = arith.constant dense<0.000000e+00> : vector<8x32xf32>
    %44 = tpu.matmul %42, %43, %cst_31 {dimension_numbers = #tpu.dot_dimension_numbers<[1], [0], [0], [1], [0, 0, 1, 1], [], []>} : vector<8x4xf32>, vector<4x32xf32>, vector<8x32xf32> -> vector<8x32xf32>
    %45 = arith.addf %40, %44 : vector<8x32xf32>
    %c1_32 = arith.constant 1 : index
    %c0_33 = arith.constant 0 : index
    %c0_34 = arith.constant 0 : index
    %46 = vector.load %arg3[%c1_32, %c0_33, %c0_34] : memref<3x8x4xf32, #tpu.memory_space<vmem>>, vector<1x8x4xf32>
    %47 = vector.shape_cast %46 : vector<1x8x4xf32> to vector<8x4xf32>
    %48 = vector.extract_strided_slice %39 {offsets = [0, 1], sizes = [4, 32], strides = [1, 1]} : vector<4x34xf32> to vector<4x32xf32>
    %cst_35 = arith.constant dense<0.000000e+00> : vector<8x32xf32>
    %49 = tpu.matmul %47, %48, %cst_35 {dimension_numbers = #tpu.dot_dimension_numbers<[1], [0], [0], [1], [0, 0, 1, 1], [], []>} : vector<8x4xf32>, vector<4x32xf32>, vector<8x32xf32> -> vector<8x32xf32>
    %50 = arith.addf %45, %49 : vector<8x32xf32>
    %c2_36 = arith.constant 2 : index
    %c0_37 = arith.constant 0 : index
    %c0_38 = arith.constant 0 : index
    %51 = vector.load %arg3[%c2_36, %c0_37, %c0_38] : memref<3x8x4xf32, #tpu.memory_space<vmem>>, vector<1x8x4xf32>
    %52 = vector.shape_cast %51 : vector<1x8x4xf32> to vector<8x4xf32>
    %53 = vector.extract_strided_slice %39 {offsets = [0, 2], sizes = [4, 32], strides = [1, 1]} : vector<4x34xf32> to vector<4x32xf32>
    %cst_39 = arith.constant dense<0.000000e+00> : vector<8x32xf32>
    %54 = tpu.matmul %52, %53, %cst_39 {dimension_numbers = #tpu.dot_dimension_numbers<[1], [0], [0], [1], [0, 0, 1, 1], [], []>} : vector<8x4xf32>, vector<4x32xf32>, vector<8x32xf32> -> vector<8x32xf32>
    %55 = arith.addf %50, %54 : vector<8x32xf32>
    %c0_40 = arith.constant 0 : index
    %c0_41 = arith.constant 0 : index
    %56 = vector.load %arg4[%c0_40, %c0_41] : memref<8x1xf32, #tpu.memory_space<vmem>>, vector<8x1xf32>
    %57 = vector.broadcast %56 : vector<8x1xf32> to vector<8x32xf32>
    %58 = arith.addf %55, %57 : vector<8x32xf32>
    %cst_42 = arith.constant 0.000000e+00 : f32
    %59 = vector.broadcast %cst_42 : f32 to vector<8x32xf32>
    %60 = arith.cmpf ogt, %58, %59 : vector<8x32xf32>
    %61 = math.exp %58 : vector<8x32xf32>
    %cst_43 = arith.constant 1.000000e+00 : f32
    %62 = vector.broadcast %cst_43 : f32 to vector<8x32xf32>
    %63 = arith.subf %61, %62 : vector<8x32xf32>
    %64 = arith.select %60, %58, %63 : vector<8x32xi1>, vector<8x32xf32>
    %cst_44 = arith.constant dense<0.000000e+00> : vector<8xf32>
    %65 = vector.multi_reduction <add>, %64, %cst_44 [1] : vector<8x32xf32> to vector<8xf32>
    %66 = vector.shape_cast %65 : vector<8xf32> to vector<8x1xf32>
    %c1_45 = arith.constant 1 : index
    %c0_46 = arith.constant 0 : index
    %c0_47 = arith.constant 0 : index
    %67 = vector.load %arg5[%c1_45, %c0_46, %c0_47] : memref<2x8x1xf32, #tpu.memory_space<vmem>>, vector<1x8x1xf32>
    %68 = vector.shape_cast %67 : vector<1x8x1xf32> to vector<8x1xf32>
    %69 = vector.shape_cast %66 : vector<8x1xf32> to vector<1x8x1xf32>
    tpu.vector_store %arg5[%c1_45, %c0_46, %c0_47], %69 {strides = array<i32>} : memref<2x8x1xf32, #tpu.memory_space<vmem>>, vector<1x8x1xf32>,
    %70 = arith.mulf %64, %64 : vector<8x32xf32>
    %cst_48 = arith.constant dense<0.000000e+00> : vector<8xf32>
    %71 = vector.multi_reduction <add>, %70, %cst_48 [1] : vector<8x32xf32> to vector<8xf32>
    %72 = vector.shape_cast %71 : vector<8xf32> to vector<8x1xf32>
    %c1_49 = arith.constant 1 : index
    %c0_50 = arith.constant 0 : index
    %c0_51 = arith.constant 0 : index
    %73 = vector.load %arg6[%c1_49, %c0_50, %c0_51] : memref<2x8x1xf32, #tpu.memory_space<vmem>>, vector<1x8x1xf32>
    %74 = vector.shape_cast %73 : vector<1x8x1xf32> to vector<8x1xf32>
    %75 = vector.shape_cast %72 : vector<8x1xf32> to vector<1x8x1xf32>
    tpu.vector_store %arg6[%c1_49, %c0_50, %c0_51], %75 {strides = array<i32>} : memref<2x8x1xf32, #tpu.memory_space<vmem>>, vector<1x8x1xf32>,
    return
  }
  func.func @transform_0(%arg0: i32, %arg1: i32) -> (i32, i32, i32) {
    %c0_i32 = arith.constant 0 : i32
    %c0_i32_0 = arith.constant 0 : i32
    %c0_i32_1 = arith.constant 0 : i32
    return %arg0, %c0_i32, %c0_i32_0 : i32, i32, i32
  }
  func.func @transform_1(%arg0: i32, %arg1: i32) -> (i32, i32, i32) {
    %c0_i32 = arith.constant 0 : i32
    %c0_i32_0 = arith.constant 0 : i32
    %c0_i32_1 = arith.constant 0 : i32
    return %c0_i32, %arg1, %c0_i32_0 : i32, i32, i32
  }
  func.func @transform_2(%arg0: i32, %arg1: i32) -> (i32, i32) {
    %c0_i32 = arith.constant 0 : i32
    %c0_i32_0 = arith.constant 0 : i32
    return %arg1, %c0_i32 : i32, i32
  }
  func.func @transform_3(%arg0: i32, %arg1: i32) -> (i32, i32, i32) {
    %c0_i32 = arith.constant 0 : i32
    %c0_i32_0 = arith.constant 0 : i32
    return %arg0, %arg1, %c0_i32 : i32, i32, i32
  }
  func.func @transform_4(%arg0: i32, %arg1: i32) -> (i32, i32, i32) {
    %c0_i32 = arith.constant 0 : i32
    %c0_i32_0 = arith.constant 0 : i32
    return %arg0, %arg1, %c0_i32 : i32, i32, i32
  }
}

</mosaic_0001>

<llo_original>
// kernel: tpu_custom_call.1
$region0: #{tpu_custom_call.1}
  #allocation0 [shape = 'u32[]', space=smem, size = 0x4, offset = 0x4, fixed_abs, tag = 'smem constant byte address 0x4 - core index']
  #allocation1 [shape = 'u32[144,128]{1,0:T(1,128)}', space=vmem, size = 0x12000, scoped, tag = 'internal scratch']
  %s0 = inlined_call_operand.vmem [shape: f32[2,4,34], index: 0, kind: input, shape index: {}]
  %s1 = inlined_call_operand.vmem [shape: f32[3,8,4], index: 1, kind: input, shape index: {}]
  %s2 = inlined_call_operand.vmem [shape: f32[8,1], index: 2, kind: input, shape index: {}]
  %s3 = inlined_call_operand.vmem [shape: f32[2,8,1], index: 3, kind: output, shape index: {0}]
  %s4 = inlined_call_operand.vmem [shape: f32[2,8,1], index: 4, kind: output, shape index: {1}]
  %5 = xla_tuple %s3, %s4
  %s6 = sld [smem:[#allocation0]]
  $region30: #{tpu_custom_call.1} parent=0
    _
  %s8 = ssub.s32 1, %s6
  %s9 = scalar_select 0, %s8, %s6
  // Predicated region
  $region2: #{tpu_custom_call.1} parent=0 // pred_check
    _
  $region3: #{tpu_custom_call.1} parent=0 // pred_check_branch
    %11 = sbr.rel (0) target = $region5
  $region4: #{tpu_custom_call.1} parent=0 // pred_region
    _
  $region5: #{tpu_custom_call.1} parent=0 // pred_fallthru
    _
  // Predicated region
  $region6: #{tpu_custom_call.1} parent=0 // pred_check
    _
  $region7: #{tpu_custom_call.1} parent=0 // pred_check_branch
    %13 = sbr.rel (0) target = $region9
  $region8: #{tpu_custom_call.1} parent=0 // pred_region
    _
  $region9: #{tpu_custom_call.1} parent=0 // pred_fallthru
    _
  // Predicated region
  $region10: #{tpu_custom_call.1} parent=0 // pred_check
    _
  $region11: #{tpu_custom_call.1} parent=0 // pred_check_branch
    %15 = sbr.rel (0) target = $region13
  $region12: #{tpu_custom_call.1} parent=0 // pred_region
    _
  $region13: #{tpu_custom_call.1} parent=0 // pred_fallthru
    _
  %v16 = vld [vmem:[%s0] sm:$0xf]
  %v17 = vld [vmem:[%s1] sm:$0xff]
  %s18 = scalar_lea.vmem %s1, 8
  %v19 = vld [vmem:[%s18] sm:$0xff]
  %21 = vrot.lane.b32.xlu0 %v16, 127
  %v22 = vpop.permute.xlu0 %21
  %vm23 = vcmask 31744
  %v25 = vsel %vm23, %v19, 0
  %vm27 = vcmask 1043456
  %v28 = vsel %vm27, %v22, 0
  %30 = vmatprep.subr.mxu0 0.0
  %31 = vmatpush1.msra.mxu0 %v28
  %32 = vmatprep.subr.mxu0 0.0
  %33 = vmatpush1.msra.mxu0 0.0
  %34 = vmatprep.subr.mxu0 0.0
  %35 = vmatpush1.msra.mxu0 0.0
  %36 = vmatprep.subr.mxu0 0.0
  %37 = vmatpush1.msra.mxu0 0.0
  %38 = vmatprep.subr.mxu0 0.0
  %39 = vmatpush1.msra.mxu0 0.0
  %40 = vmatprep.subr.mxu0 0.0
  %41 = vmatpush1.msra.mxu0 0.0
  %42 = vmatprep.subr.mxu0 0.0
  %43 = vmatpush1.msra.mxu0 0.0
  %44 = vmatprep.subr.mxu0 0.0
  %45 = vmatpush1.msra.mxu0 0.0
  %46 = vmatprep.subr.mxu0 0.0
  %47 = vmatpush1.msra.mxu0 0.0
  %48 = vmatprep.subr.mxu0 0.0
  %49 = vmatpush1.msra.mxu0 0.0
  %50 = vmatprep.subr.mxu0 0.0
  %51 = vmatpush1.msra.mxu0 0.0
  %52 = vmatprep.subr.mxu0 0.0
  %53 = vmatpush1.msra.mxu0 0.0
  %54 = vmatprep.subr.mxu0 0.0
  %55 = vmatpush1.msra.mxu0 0.0
  %56 = vmatprep.subr.mxu0 0.0
  %57 = vmatpush1.msra.mxu0 0.0
  %58 = vmatprep.subr.mxu0 0.0
  %59 = vmatpush1.msra.mxu0 0.0
  %60 = vmatprep.subr.mxu0 0.0
  %61 = vmatpush1.msra.mxu0 0.0
  %62 = vmatprep.subr.mxu0 0.0
  %63 = vmatpush1.msra.mxu0 0.0
  %64 = vmatprep.subr.mxu0 0.0
  %65 = vmatpush1.msra.mxu0 0.0
  %66 = vmatprep.subr.mxu0 0.0
  %67 = vmatpush1.msra.mxu0 0.0
  %68 = vmatprep.subr.mxu0 0.0
  %69 = vmatpush1.msra.mxu0 0.0
  %70 = vmatprep.subr.mxu0 0.0
  %71 = vmatpush1.msra.mxu0 0.0
  %72 = vmatprep.subr.mxu0 0.0
  %73 = vmatpush1.msra.mxu0 0.0
  %74 = vmatprep.subr.mxu0 0.0
  %75 = vmatpush1.msra.mxu0 0.0
  %76 = vmatprep.subr.mxu0 0.0
  %77 = vmatpush1.msra.mxu0 0.0
  %78 = vmatprep.subr.mxu0 0.0
  %79 = vmatpush1.msra.mxu0 0.0
  %80 = vmatprep.subr.mxu0 0.0
  %81 = vmatpush1.msra.mxu0 0.0
  %82 = vmatprep.subr.mxu0 0.0
  %83 = vmatpush1.msra.mxu0 0.0
  %84 = vmatprep.subr.mxu0 0.0
  %85 = vmatpush1.msra.mxu0 0.0
  %86 = vmatprep.subr.mxu0 0.0
  %87 = vmatpush1.msra.mxu0 0.0
  %88 = vmatprep.subr.mxu0 0.0
  %89 = vmatpush1.msra.mxu0 0.0
  %90 = vmatprep.subr.mxu0 0.0
  %91 = vmatpush1.msra.mxu0 0.0
  %92 = vmatprep.subr.mxu0 0.0
  %93 = vmatpush1.msra.mxu0 0.0
  %94 = vmatprep.mubr.f32.mxu0 0.0
  %95 = vmatmul.mubr.f32.gmra.mrb[0].mxu0 %v25
  %v96 = vpop.f32.mrb[0].mxu0
  %v97 = vadd.f32 0.0, %v96
  %v98 = vpop.f32.mrb[0].mxu0
  %99 = vdwg.mxu0
  %v101 = vsel %vm23, %v17, 0
  %v103 = vsel %vm27, %v16, 0
  %105 = vmatprep.subr.mxu0 0.0
  %106 = vmatpush1.msra.mxu0 %v103
  %107 = vmatprep.subr.mxu0 0.0
  %108 = vmatpush1.msra.mxu0 0.0
  %109 = vmatprep.subr.mxu0 0.0
  %110 = vmatpush1.msra.mxu0 0.0
  %111 = vmatprep.subr.mxu0 0.0
  %112 = vmatpush1.msra.mxu0 0.0
  %113 = vmatprep.subr.mxu0 0.0
  %114 = vmatpush1.msra.mxu0 0.0
  %115 = vmatprep.subr.mxu0 0.0
  %116 = vmatpush1.msra.mxu0 0.0
  %117 = vmatprep.subr.mxu0 0.0
  %118 = vmatpush1.msra.mxu0 0.0
  %119 = vmatprep.subr.mxu0 0.0
  %120 = vmatpush1.msra.mxu0 0.0
  %121 = vmatprep.subr.mxu0 0.0
  %122 = vmatpush1.msra.mxu0 0.0
  %123 = vmatprep.subr.mxu0 0.0
  %124 = vmatpush1.msra.mxu0 0.0
  %125 = vmatprep.subr.mxu0 0.0
  %126 = vmatpush1.msra.mxu0 0.0
  %127 = vmatprep.subr.mxu0 0.0
  %128 = vmatpush1.msra.mxu0 0.0
  %129 = vmatprep.subr.mxu0 0.0
  %130 = vmatpush1.msra.mxu0 0.0
  %131 = vmatprep.subr.mxu0 0.0
  %132 = vmatpush1.msra.mxu0 0.0
  %133 = vmatprep.subr.mxu0 0.0
  %134 = vmatpush1.msra.mxu0 0.0
  %135 = vmatprep.subr.mxu0 0.0
  %136 = vmatpush1.msra.mxu0 0.0
  %137 = vmatprep.subr.mxu0 0.0
  %138 = vmatpush1.msra.mxu0 0.0
  %139 = vmatprep.subr.mxu0 0.0
  %140 = vmatpush1.msra.mxu0 0.0
  %141 = vmatprep.subr.mxu0 0.0
  %142 = vmatpush1.msra.mxu0 0.0
  %143 = vmatprep.subr.mxu0 0.0
  %144 = vmatpush1.msra.mxu0 0.0
  %145 = vmatprep.subr.mxu0 0.0
  %146 = vmatpush1.msra.mxu0 0.0
  %147 = vmatprep.subr.mxu0 0.0
  %148 = vmatpush1.msra.mxu0 0.0
  %149 = vmatprep.subr.mxu0 0.0
  %150 = vmatpush1.msra.mxu0 0.0
  %151 = vmatprep.subr.mxu0 0.0
  %152 = vmatpush1.msra.mxu0 0.0
  %153 = vmatprep.subr.mxu0 0.0
  %154 = vmatpush1.msra.mxu0 0.0
  %155 = vmatprep.subr.mxu0 0.0
  %156 = vmatpush1.msra.mxu0 0.0
  %157 = vmatprep.subr.mxu0 0.0
  %158 = vmatpush1.msra.mxu0 0.0
  %159 = vmatprep.subr.mxu0 0.0
  %160 = vmatpush1.msra.mxu0 0.0
  %161 = vmatprep.subr.mxu0 0.0
  %162 = vmatpush1.msra.mxu0 0.0
  %163 = vmatprep.subr.mxu0 0.0
  %164 = vmatpush1.msra.mxu0 0.0
  %165 = vmatprep.subr.mxu0 0.0
  %166 = vmatpush1.msra.mxu0 0.0
  %167 = vmatprep.subr.mxu0 0.0
  %168 = vmatpush1.msra.mxu0 0.0
  %169 = vmatprep.mubr.f32.mxu0 0.0
  %170 = vmatmul.mubr.f32.gmra.mrb[0].mxu0 %v101
  %v171 = vpop.f32.mrb[0].mxu0
  %v172 = vadd.f32 %v97, %v171
  %v173 = vpop.f32.mrb[0].mxu0
  %174 = vdwg.mxu0
  %s175 = scalar_lea.vmem %s1, 16
  %v176 = vld [vmem:[%s175] sm:$0xff]
  %177 = vrot.lane.b32.xlu0 %v16, 126
  %v178 = vpop.permute.xlu0 %177
  %v180 = vsel %vm23, %v176, 0
  %v182 = vsel %vm27, %v178, 0
  %184 = vmatprep.subr.mxu0 0.0
  %185 = vmatpush1.msra.mxu0 %v182
  %186 = vmatprep.subr.mxu0 0.0
  %187 = vmatpush1.msra.mxu0 0.0
  %188 = vmatprep.subr.mxu0 0.0
  %189 = vmatpush1.msra.mxu0 0.0
  %190 = vmatprep.subr.mxu0 0.0
  %191 = vmatpush1.msra.mxu0 0.0
  %192 = vmatprep.subr.mxu0 0.0
  %193 = vmatpush1.msra.mxu0 0.0
  %194 = vmatprep.subr.mxu0 0.0
  %195 = vmatpush1.msra.mxu0 0.0
  %196 = vmatprep.subr.mxu0 0.0
  %197 = vmatpush1.msra.mxu0 0.0
  %198 = vmatprep.subr.mxu0 0.0
  %199 = vmatpush1.msra.mxu0 0.0
  %200 = vmatprep.subr.mxu0 0.0
  %201 = vmatpush1.msra.mxu0 0.0
  %202 = vmatprep.subr.mxu0 0.0
  %203 = vmatpush1.msra.mxu0 0.0
  %204 = vmatprep.subr.mxu0 0.0
  %205 = vmatpush1.msra.mxu0 0.0
  %206 = vmatprep.subr.mxu0 0.0
  %207 = vmatpush1.msra.mxu0 0.0
  %208 = vmatprep.subr.mxu0 0.0
  %209 = vmatpush1.msra.mxu0 0.0
  %210 = vmatprep.subr.mxu0 0.0
  %211 = vmatpush1.msra.mxu0 0.0
  %212 = vmatprep.subr.mxu0 0.0
  %213 = vmatpush1.msra.mxu0 0.0
  %214 = vmatprep.subr.mxu0 0.0
  %215 = vmatpush1.msra.mxu0 0.0
  %216 = vmatprep.subr.mxu0 0.0
  %217 = vmatpush1.msra.mxu0 0.0
  %218 = vmatprep.subr.mxu0 0.0
  %219 = vmatpush1.msra.mxu0 0.0
  %220 = vmatprep.subr.mxu0 0.0
  %221 = vmatpush1.msra.mxu0 0.0
  %222 = vmatprep.subr.mxu0 0.0
  %223 = vmatpush1.msra.mxu0 0.0
  %224 = vmatprep.subr.mxu0 0.0
  %225 = vmatpush1.msra.mxu0 0.0
  %226 = vmatprep.subr.mxu0 0.0
  %227 = vmatpush1.msra.mxu0 0.0
  %228 = vmatprep.subr.mxu0 0.0
  %229 = vmatpush1.msra.mxu0 0.0
  %230 = vmatprep.subr.mxu0 0.0
  %231 = vmatpush1.msra.mxu0 0.0
  %232 = vmatprep.subr.mxu0 0.0
  %233 = vmatpush1.msra.mxu0 0.0
  %234 = vmatprep.subr.mxu0 0.0
  %235 = vmatpush1.msra.mxu0 0.0
  %236 = vmatprep.subr.mxu0 0.0
  %237 = vmatpush1.msra.mxu0 0.0
  %238 = vmatprep.subr.mxu0 0.0
  %239 = vmatpush1.msra.mxu0 0.0
  %240 = vmatprep.subr.mxu0 0.0
  %241 = vmatpush1.msra.mxu0 0.0
  %242 = vmatprep.subr.mxu0 0.0
  %243 = vmatpush1.msra.mxu0 0.0
  %244 = vmatprep.subr.mxu0 0.0
  %245 = vmatpush1.msra.mxu0 0.0
  %246 = vmatprep.subr.mxu0 0.0
  %247 = vmatpush1.msra.mxu0 0.0
  %248 = vmatprep.mubr.f32.mxu0 0.0
  %249 = vmatmul.mubr.f32.gmra.mrb[0].mxu0 %v180
  %v250 = vpop.f32.mrb[0].mxu0
  %v251 = vadd.f32 0.0, %v250
  %v252 = vpop.f32.mrb[0].mxu0
  %253 = vdwg.mxu0
  %v254 = vadd.f32 %v172, %v251
  %v255 = vld [vmem:[%s2] sm:$0xff]
  %257 = vset.pattern.permute.xlu0 0
  %258 = vperm.xlu0 %257, %v255
  %v259 = vpop.permute.xlu0 %258
  %v261 = vadd.f32 %v254, %v259
  %vm262 = vcmp.gt.f32.partialorder %v261, 0.0
  %v263 = vmul.f32 %v261, 1.442695
  %v264 = vpow.pop %v263
  %v265 = vsub.f32 %v264, 1.0
  %v266 = vsel %vm262, %v261, %v265
  %vm267 = vcmask 261120
  %v268 = vsel %vm267, %v266, 0.0
  %269 = vadd.xlane.f32.xlu0 %v268
  %v270 = vpop.xlane.xlu0 %269
  %vm271 = vcmask 7168
  %272 = vst.msk [vmem:[%s3] sm:$0xff] %vm271, %v270
  %v273 = vmul.f32 %v266, %v266
  %v274 = vsel %vm267, %v273, 0.0
  %275 = vadd.xlane.f32.xlu0 %v274
  %v276 = vpop.xlane.xlu0 %275
  %277 = vst.msk [vmem:[%s4] sm:$0xff] %vm271, %v276
  %s278 = scalar_lea.vmem %s0, 4
  %v279 = vld [vmem:[%s278] sm:$0xf]
  %v280 = vld [vmem:[%s1] sm:$0xff]
  %v281 = vld [vmem:[%s18] sm:$0xff]
  %283 = vrot.lane.b32.xlu0 %v279, 127
  %v284 = vpop.permute.xlu0 %283
  %v286 = vsel %vm23, %v281, 0
  %v288 = vsel %vm27, %v284, 0
  %290 = vmatprep.subr.mxu0 0.0
  %291 = vmatpush1.msra.mxu0 %v288
  %292 = vmatprep.subr.mxu0 0.0
  %293 = vmatpush1.msra.mxu0 0.0
  %294 = vmatprep.subr.mxu0 0.0
  %295 = vmatpush1.msra.mxu0 0.0
  %296 = vmatprep.subr.mxu0 0.0
  %297 = vmatpush1.msra.mxu0 0.0
  %298 = vmatprep.subr.mxu0 0.0
  %299 = vmatpush1.msra.mxu0 0.0
  %300 = vmatprep.subr.mxu0 0.0
  %301 = vmatpush1.msra.mxu0 0.0
  %302 = vmatprep.subr.mxu0 0.0
  %303 = vmatpush1.msra.mxu0 0.0
  %304 = vmatprep.subr.mxu0 0.0
  %305 = vmatpush1.msra.mxu0 0.0
  %306 = vmatprep.subr.mxu0 0.0
  %307 = vmatpush1.msra.mxu0 0.0
  %308 = vmatprep.subr.mxu0 0.0
  %309 = vmatpush1.msra.mxu0 0.0
  %310 = vmatprep.subr.mxu0 0.0
  %311 = vmatpush1.msra.mxu0 0.0
  %312 = vmatprep.subr.mxu0 0.0
  %313 = vmatpush1.msra.mxu0 0.0
  %314 = vmatprep.subr.mxu0 0.0
  %315 = vmatpush1.msra.mxu0 0.0
  %316 = vmatprep.subr.mxu0 0.0
  %317 = vmatpush1.msra.mxu0 0.0
  %318 = vmatprep.subr.mxu0 0.0
  %319 = vmatpush1.msra.mxu0 0.0
  %320 = vmatprep.subr.mxu0 0.0
  %321 = vmatpush1.msra.mxu0 0.0
  %322 = vmatprep.subr.mxu0 0.0
  %323 = vmatpush1.msra.mxu0 0.0
  %324 = vmatprep.subr.mxu0 0.0
  %325 = vmatpush1.msra.mxu0 0.0
  %326 = vmatprep.subr.mxu0 0.0
  %327 = vmatpush1.msra.mxu0 0.0
  %328 = vmatprep.subr.mxu0 0.0
  %329 = vmatpush1.msra.mxu0 0.0
  %330 = vmatprep.subr.mxu0 0.0
  %331 = vmatpush1.msra.mxu0 0.0
  %332 = vmatprep.subr.mxu0 0.0
  %333 = vmatpush1.msra.mxu0 0.0
  %334 = vmatprep.subr.mxu0 0.0
  %335 = vmatpush1.msra.mxu0 0.0
  %336 = vmatprep.subr.mxu0 0.0
  %337 = vmatpush1.msra.mxu0 0.0
  %338 = vmatprep.subr.mxu0 0.0
  %339 = vmatpush1.msra.mxu0 0.0
  %340 = vmatprep.subr.mxu0 0.0
  %341 = vmatpush1.msra.mxu0 0.0
  %342 = vmatprep.subr.mxu0 0.0
  %343 = vmatpush1.msra.mxu0 0.0
  %344 = vmatprep.subr.mxu0 0.0
  %345 = vmatpush1.msra.mxu0 0.0
  %346 = vmatprep.subr.mxu0 0.0
  %347 = vmatpush1.msra.mxu0 0.0
  %348 = vmatprep.subr.mxu0 0.0
  %349 = vmatpush1.msra.mxu0 0.0
  %350 = vmatprep.subr.mxu0 0.0
  %351 = vmatpush1.msra.mxu0 0.0
  %352 = vmatprep.subr.mxu0 0.0
  %353 = vmatpush1.msra.mxu0 0.0
  %354 = vmatprep.mubr.f32.mxu0 0.0
  %355 = vmatmul.mubr.f32.gmra.mrb[0].mxu0 %v286
  %v356 = vpop.f32.mrb[0].mxu0
  %v357 = vadd.f32 0.0, %v356
  %v358 = vpop.f32.mrb[0].mxu0
  %359 = vdwg.mxu0
  %v361 = vsel %vm23, %v280, 0
  %v363 = vsel %vm27, %v279, 0
  %365 = vmatprep.subr.mxu0 0.0
  %366 = vmatpush1.msra.mxu0 %v363
  %367 = vmatprep.subr.mxu0 0.0
  %368 = vmatpush1.msra.mxu0 0.0
  %369 = vmatprep.subr.mxu0 0.0
  %370 = vmatpush1.msra.mxu0 0.0
  %371 = vmatprep.subr.mxu0 0.0
  %372 = vmatpush1.msra.mxu0 0.0
  %373 = vmatprep.subr.mxu0 0.0
  %374 = vmatpush1.msra.mxu0 0.0
  %375 = vmatprep.subr.mxu0 0.0
  %376 = vmatpush1.msra.mxu0 0.0
  %377 = vmatprep.subr.mxu0 0.0
  %378 = vmatpush1.msra.mxu0 0.0
  %379 = vmatprep.subr.mxu0 0.0
  %380 = vmatpush1.msra.mxu0 0.0
  %381 = vmatprep.subr.mxu0 0.0
  %382 = vmatpush1.msra.mxu0 0.0
  %383 = vmatprep.subr.mxu0 0.0
  %384 = vmatpush1.msra.mxu0 0.0
  %385 = vmatprep.subr.mxu0 0.0
  %386 = vmatpush1.msra.mxu0 0.0
  %387 = vmatprep.subr.mxu0 0.0
  %388 = vmatpush1.msra.mxu0 0.0
  %389 = vmatprep.subr.mxu0 0.0
  %390 = vmatpush1.msra.mxu0 0.0
  %391 = vmatprep.subr.mxu0 0.0
  %392 = vmatpush1.msra.mxu0 0.0
  %393 = vmatprep.subr.mxu0 0.0
  %394 = vmatpush1.msra.mxu0 0.0
  %395 = vmatprep.subr.mxu0 0.0
  %396 = vmatpush1.msra.mxu0 0.0
  %397 = vmatprep.subr.mxu0 0.0
  %398 = vmatpush1.msra.mxu0 0.0
  %399 = vmatprep.subr.mxu0 0.0
  %400 = vmatpush1.msra.mxu0 0.0
  %401 = vmatprep.subr.mxu0 0.0
  %402 = vmatpush1.msra.mxu0 0.0
  %403 = vmatprep.subr.mxu0 0.0
  %404 = vmatpush1.msra.mxu0 0.0
  %405 = vmatprep.subr.mxu0 0.0
  %406 = vmatpush1.msra.mxu0 0.0
  %407 = vmatprep.subr.mxu0 0.0
  %408 = vmatpush1.msra.mxu0 0.0
  %409 = vmatprep.subr.mxu0 0.0
  %410 = vmatpush1.msra.mxu0 0.0
  %411 = vmatprep.subr.mxu0 0.0
  %412 = vmatpush1.msra.mxu0 0.0
  %413 = vmatprep.subr.mxu0 0.0
  %414 = vmatpush1.msra.mxu0 0.0
  %415 = vmatprep.subr.mxu0 0.0
  %416 = vmatpush1.msra.mxu0 0.0
  %417 = vmatprep.subr.mxu0 0.0
  %418 = vmatpush1.msra.mxu0 0.0
  %419 = vmatprep.subr.mxu0 0.0
  %420 = vmatpush1.msra.mxu0 0.0
  %421 = vmatprep.subr.mxu0 0.0
  %422 = vmatpush1.msra.mxu0 0.0
  %423 = vmatprep.subr.mxu0 0.0
  %424 = vmatpush1.msra.mxu0 0.0
  %425 = vmatprep.subr.mxu0 0.0
  %426 = vmatpush1.msra.mxu0 0.0
  %427 = vmatprep.subr.mxu0 0.0
  %428 = vmatpush1.msra.mxu0 0.0
  %429 = vmatprep.mubr.f32.mxu0 0.0
  %430 = vmatmul.mubr.f32.gmra.mrb[0].mxu0 %v361
  %v431 = vpop.f32.mrb[0].mxu0
  %v432 = vadd.f32 %v357, %v431
  %v433 = vpop.f32.mrb[0].mxu0
  %434 = vdwg.mxu0
  %v435 = vld [vmem:[%s175] sm:$0xff]
  %436 = vrot.lane.b32.xlu0 %v279, 126
  %v437 = vpop.permute.xlu0 %436
  %v439 = vsel %vm23, %v435, 0
  %v441 = vsel %vm27, %v437, 0
  %443 = vmatprep.subr.mxu0 0.0
  %444 = vmatpush1.msra.mxu0 %v441
  %445 = vmatprep.subr.mxu0 0.0
  %446 = vmatpush1.msra.mxu0 0.0
  %447 = vmatprep.subr.mxu0 0.0
  %448 = vmatpush1.msra.mxu0 0.0
  %449 = vmatprep.subr.mxu0 0.0
  %450 = vmatpush1.msra.mxu0 0.0
  %451 = vmatprep.subr.mxu0 0.0
  %452 = vmatpush1.msra.mxu0 0.0
  %453 = vmatprep.subr.mxu0 0.0
  %454 = vmatpush1.msra.mxu0 0.0
  %455 = vmatprep.subr.mxu0 0.0
  %456 = vmatpush1.msra.mxu0 0.0
  %457 = vmatprep.subr.mxu0 0.0
  %458 = vmatpush1.msra.mxu0 0.0
  %459 = vmatprep.subr.mxu0 0.0
  %460 = vmatpush1.msra.mxu0 0.0
  %461 = vmatprep.subr.mxu0 0.0
  %462 = vmatpush1.msra.mxu0 0.0
  %463 = vmatprep.subr.mxu0 0.0
  %464 = vmatpush1.msra.mxu0 0.0
  %465 = vmatprep.subr.mxu0 0.0
  %466 = vmatpush1.msra.mxu0 0.0
  %467 = vmatprep.subr.mxu0 0.0
  %468 = vmatpush1.msra.mxu0 0.0
  %469 = vmatprep.subr.mxu0 0.0
  %470 = vmatpush1.msra.mxu0 0.0
  %471 = vmatprep.subr.mxu0 0.0
  %472 = vmatpush1.msra.mxu0 0.0
  %473 = vmatprep.subr.mxu0 0.0
  %474 = vmatpush1.msra.mxu0 0.0
  %475 = vmatprep.subr.mxu0 0.0
  %476 = vmatpush1.msra.mxu0 0.0
  %477 = vmatprep.subr.mxu0 0.0
  %478 = vmatpush1.msra.mxu0 0.0
  %479 = vmatprep.subr.mxu0 0.0
  %480 = vmatpush1.msra.mxu0 0.0
  %481 = vmatprep.subr.mxu0 0.0
  %482 = vmatpush1.msra.mxu0 0.0
  %483 = vmatprep.subr.mxu0 0.0
  %484 = vmatpush1.msra.mxu0 0.0
  %485 = vmatprep.subr.mxu0 0.0
  %486 = vmatpush1.msra.mxu0 0.0
  %487 = vmatprep.subr.mxu0 0.0
  %488 = vmatpush1.msra.mxu0 0.0
  %489 = vmatprep.subr.mxu0 0.0
  %490 = vmatpush1.msra.mxu0 0.0
  %491 = vmatprep.subr.mxu0 0.0
  %492 = vmatpush1.msra.mxu0 0.0
  %493 = vmatprep.subr.mxu0 0.0
  %494 = vmatpush1.msra.mxu0 0.0
  %495 = vmatprep.subr.mxu0 0.0
  %496 = vmatpush1.msra.mxu0 0.0
  %497 = vmatprep.subr.mxu0 0.0
  %498 = vmatpush1.msra.mxu0 0.0
  %499 = vmatprep.subr.mxu0 0.0
  %500 = vmatpush1.msra.mxu0 0.0
  %501 = vmatprep.subr.mxu0 0.0
  %502 = vmatpush1.msra.mxu0 0.0
  %503 = vmatprep.subr.mxu0 0.0
  %504 = vmatpush1.msra.mxu0 0.0
  %505 = vmatprep.subr.mxu0 0.0
  %506 = vmatpush1.msra.mxu0 0.0
  %507 = vmatprep.mubr.f32.mxu0 0.0
  %508 = vmatmul.mubr.f32.gmra.mrb[0].mxu0 %v439
  %v509 = vpop.f32.mrb[0].mxu0
  %v510 = vadd.f32 0.0, %v509
  %v511 = vpop.f32.mrb[0].mxu0
  %512 = vdwg.mxu0
  %v513 = vadd.f32 %v432, %v510
  %v514 = vld [vmem:[%s2] sm:$0xff]
  %516 = vset.pattern.permute.xlu0 0
  %517 = vperm.xlu0 %516, %v514
  %v518 = vpop.permute.xlu0 %517
  %v520 = vadd.f32 %v513, %v518
  %vm521 = vcmp.gt.f32.partialorder %v520, 0.0
  %v522 = vmul.f32 %v520, 1.442695
  %v523 = vpow.pop %v522
  %v524 = vsub.f32 %v523, 1.0
  %v525 = vsel %vm521, %v520, %v524
  %v526 = vsel %vm267, %v525, 0.0
  %527 = vadd.xlane.f32.xlu0 %v526
  %v528 = vpop.xlane.xlu0 %527
  %s529 = scalar_lea.vmem %s3, 8
  %530 = vst.msk [vmem:[%s529] sm:$0xff] %vm271, %v528
  %v531 = vmul.f32 %v525, %v525
  %v532 = vsel %vm267, %v531, 0.0
  %533 = vadd.xlane.f32.xlu0 %v532
  %v534 = vpop.xlane.xlu0 %533
  %s535 = scalar_lea.vmem %s4, 8
  %536 = vst.msk [vmem:[%s535] sm:$0xff] %vm271, %v534
  // Predicated region
  $region14: #{tpu_custom_call.1} parent=0 // pred_check
    _
  $region15: #{tpu_custom_call.1} parent=0 // pred_check_branch
    %538 = sbr.rel (0) target = $region17
  $region16: #{tpu_custom_call.1} parent=0 // pred_region
    _
  $region17: #{tpu_custom_call.1} parent=0 // pred_fallthru
    _
  // Predicated region
  $region18: #{tpu_custom_call.1} parent=0 // pred_check
    _
  $region19: #{tpu_custom_call.1} parent=0 // pred_check_branch
    %540 = sbr.rel (0) target = $region21
  $region20: #{tpu_custom_call.1} parent=0 // pred_region
    _
  $region21: #{tpu_custom_call.1} parent=0 // pred_fallthru
    _
  // Predicated region
  $region22: #{tpu_custom_call.1} parent=0 // pred_check
    _
  $region23: #{tpu_custom_call.1} parent=0 // pred_check_branch
    %542 = sbr.rel (0) target = $region25
  $region24: #{tpu_custom_call.1} parent=0 // pred_region
    _
  $region25: #{tpu_custom_call.1} parent=0 // pred_fallthru
    _
  // Predicated region
  $region26: #{tpu_custom_call.1} parent=0 // pred_check
    _
  $region27: #{tpu_custom_call.1} parent=0 // pred_check_branch
    %544 = sbr.rel (0) target = $region29
  $region28: #{tpu_custom_call.1} parent=0 // pred_region
    _
  $region29: #{tpu_custom_call.1} parent=0 // pred_fallthru
    _

</llo_original>
